<compile_context>
chip_gen: v6e
topology: v6e:2x2x1
jax: 0.10.0
libtpu: 0.0.40
codegen_flags: <defaults>
</compile_context>

<pallas_src>
import jax
import jax.numpy as jnp
from jax.experimental import pallas as pl
from jax.experimental.pallas import tpu as pltpu

LEAKY_SLOPE = 0.01
LN_EPS = 1e-5


def _round_up(n, m):
    return (n + m - 1) // m * m


def _leaky_relu(h):
    return jnp.where(h >= 0.0, h, LEAKY_SLOPE * h)


def _layer_norm_no_affine(h):
    # One-pass biased variance; rsqrt goes to the EUP (free slot vs VALU).
    mu = jnp.mean(h, axis=-1, keepdims=True)
    var = jnp.mean(h * h, axis=-1, keepdims=True) - mu * mu
    return (h - mu) * jax.lax.rsqrt(var + LN_EPS)


def make_mlp_kernel(num_hidden):
    """Build a fused kernel body for `num_hidden` (Linear->LeakyReLU->LN) blocks
    followed by one output Linear. Refs: x, (w,b)*(num_hidden+1), out."""

    def kernel(*refs):
        x_ref = refs[0]
        o_ref = refs[-1]
        wb = refs[1:-1]
        h = x_ref[...]
        for l in range(num_hidden):
            w_ref, b_ref = wb[2 * l], wb[2 * l + 1]
            h = jnp.dot(h, w_ref[...], preferred_element_type=jnp.float32) + b_ref[...]
            h = _leaky_relu(h)
            h = _layer_norm_no_affine(h)
        w_ref, b_ref = wb[-2], wb[-1]
        out = jnp.dot(h, w_ref[...], preferred_element_type=jnp.float32) + b_ref[...]
        o_ref[...] = out.astype(o_ref.dtype)

    return kernel


def fold_and_pad_params(params, lane_multiple=128):
    """One-time weight transform (NOT per-call):
      - fold each LayerNorm's gamma/beta into the next Linear:
          W' = gamma[:, None] * W ;  b' = b + beta @ W
      - zero-pad the output Linear's columns to a multiple of 128 lanes so the
        kernel's stores are lane-dense.
    `params` layout: (w, b, gamma, beta) * num_hidden, then (w_out, b_out).
    Returns (kernel_params tuple of 2*(num_hidden+1) arrays, true output_dim)."""
    params = list(params)
    num_hidden = (len(params) - 2) // 4
    folded = []
    w, b = params[0], params[1]
    for l in range(num_hidden):
        g, be = params[4 * l + 2], params[4 * l + 3]
        folded += [w, b]
        if l + 1 < num_hidden:
            wn, bn = params[4 * (l + 1)], params[4 * (l + 1) + 1]
        else:
            wn, bn = params[4 * num_hidden], params[4 * num_hidden + 1]
        w = g.reshape(-1, 1) * wn
        b = bn + be @ wn
    out_dim = w.shape[1]
    pad = (-out_dim) % lane_multiple
    if pad:
        w = jnp.pad(w, ((0, 0), (0, pad)))
        b = jnp.pad(b, ((0, 0), (0, pad)))
    folded += [w, b]
    return tuple(folded), out_dim


def mlp_regressor(x, kernel_params, output_dim, *, block_rows=512):
    """x: [B, input_dim] float32. kernel_params: tuple from fold_and_pad_params."""
    kernel_params = tuple(kernel_params)
    num_hidden = len(kernel_params) // 2 - 1
    batch, d_in = x.shape
    padded_out = kernel_params[-2].shape[1]

    # batch tile: multiple of 8 (f32 sublane); pad B so every grid step is full
    tb = min(block_rows, _round_up(batch, 8))
    tb = _round_up(tb, 8)
    b_pad = _round_up(batch, tb)
    if b_pad != batch:
        x = jnp.pad(x, ((0, b_pad - batch), (0, 0)))
    grid = (b_pad // tb,)

    x_spec = pl.BlockSpec((tb, d_in), lambda i: (i, 0))
    out_spec = pl.BlockSpec((tb, padded_out), lambda i: (i, 0))
    # constant block index => weights/biases stay VMEM-resident across the grid
    weight_specs = [pl.BlockSpec(tuple(p.shape), lambda i: (0, 0)) for p in kernel_params]

    # explicit VMEM budget: double-buffered x/out tiles + resident weights +
    # intermediate activations, with 2x headroom (capped below v7x physical 64 MiB)
    h_max = max(p.shape[1] for p in kernel_params[::2])
    weight_bytes = sum(int(p.size) * 4 for p in kernel_params)
    act_bytes = tb * (d_in + padded_out + 4 * h_max) * 4
    vmem_bytes = int(min(48 << 20, max(8 << 20, 2 * (2 * act_bytes + 2 * weight_bytes))))

    # scheduler hint: matmul FLOPs + bytes moved (x, out, weights once)
    dims = [d_in] + [kernel_params[2 * l].shape[1] for l in range(num_hidden + 1)]
    flops = 2 * b_pad * sum(dims[i] * dims[i + 1] for i in range(len(dims) - 1))
    bytes_accessed = (b_pad * d_in + b_pad * padded_out) * 4 + weight_bytes
    cost = pl.CostEstimate(flops=flops, transcendentals=b_pad * num_hidden,
                           bytes_accessed=bytes_accessed)

    out = pl.pallas_call(
        make_mlp_kernel(num_hidden),
        out_shape=jax.ShapeDtypeStruct((b_pad, padded_out), jnp.float32),
        grid=grid,
        in_specs=[x_spec] + weight_specs,
        out_specs=out_spec,
        compiler_params=pltpu.CompilerParams(
            dimension_semantics=("parallel",),
            vmem_limit_bytes=vmem_bytes,
        ),
        cost_estimate=cost,
    )(x, *kernel_params)
    return out[:batch, :output_dim]


def init_params(key, input_dim, mlp_layers, output_dim):
    """Deterministic synthetic init. Linear W stored as [in, out] (transpose of
    PyTorch). gamma/beta perturbed away from (1, 0) so the affine-fold path is
    actually exercised by the correctness check."""
    dims = [input_dim] + list(mlp_layers)
    params = []
    keys = jax.random.split(key, 4 * len(mlp_layers) + 2)
    ki = 0
    for i in range(len(mlp_layers)):
        fan_in, fan_out = dims[i], dims[i + 1]
        w = jax.random.normal(keys[ki], (fan_in, fan_out), jnp.float32) * (1.0 / jnp.sqrt(fan_in))
        b = jax.random.normal(keys[ki + 1], (1, fan_out), jnp.float32) * 0.01
        gamma = 1.0 + 0.1 * jax.random.normal(keys[ki + 2], (1, fan_out), jnp.float32)
        beta = 0.05 * jax.random.normal(keys[ki + 3], (1, fan_out), jnp.float32)
        params += [w, b, gamma, beta]
        ki += 4
    fan_in = dims[-1]
    w = jax.random.normal(keys[ki], (fan_in, output_dim), jnp.float32) * (1.0 / jnp.sqrt(fan_in))
    b = jax.random.normal(keys[ki + 1], (1, output_dim), jnp.float32) * 0.01
    params += [w, b]
    return tuple(params)


def reference_forward(x, params):
    """Pure-JAX reference of the eval-mode forward pass (unfolded weights)."""
    params = list(params)
    num_hidden = (len(params) - 2) // 4
    h = x
    for l in range(num_hidden):
        w, b, g, be = params[4 * l: 4 * l + 4]
        h = h @ w + b
        h = jnp.where(h >= 0, h, LEAKY_SLOPE * h)
        mu = h.mean(-1, keepdims=True)
        var = ((h - mu) ** 2).mean(-1, keepdims=True)
        h = (h - mu) / jnp.sqrt(var + LN_EPS) * g + be
    w, b = params[-2], params[-1]
    return h @ w + b


if __name__ == "__main__":
    batch = 8
    input_dim = 16
    mlp_layers = (32, 64)
    output_dim = 4

    key = jax.random.PRNGKey(0)
    kx, kp = jax.random.split(key)
    x = jax.random.normal(kx, (batch, input_dim), jnp.float32)
    params = init_params(kp, input_dim, mlp_layers, output_dim)
    kernel_params, out_dim = fold_and_pad_params(params)

    # single-tile case
    out = jax.block_until_ready(mlp_regressor(x, kernel_params, out_dim))
    ref = reference_forward(x, params)
    assert out.shape == (batch, output_dim)
    assert jnp.allclose(out, ref, atol=2e-4, rtol=2e-4), "mismatch vs JAX reference (single tile)"

    # ragged batch exercising the grid + tail padding (4 grid steps of 16 rows)
    x2 = jax.random.normal(jax.random.PRNGKey(1), (50, input_dim), jnp.float32)
    out2 = jax.block_until_ready(mlp_regressor(x2, kernel_params, out_dim, block_rows=16))
    ref2 = reference_forward(x2, params)
    assert out2.shape == (50, output_dim)
    assert jnp.allclose(out2, ref2, atol=2e-4, rtol=2e-4), "mismatch vs JAX reference (gridded)"

    print("KERNEL_OK")
</pallas_src>

<mosaic_0001>
module attributes {stable_mosaic.version = 11 : i64} {
  func.func @kernel(%arg0: i32, %arg1: memref<8x16xf32, #tpu.memory_space<vmem>>, %arg2: memref<16x32xf32, #tpu.memory_space<vmem>>, %arg3: memref<1x32xf32, #tpu.memory_space<vmem>>, %arg4: memref<32x64xf32, #tpu.memory_space<vmem>>, %arg5: memref<1x64xf32, #tpu.memory_space<vmem>>, %arg6: memref<64x128xf32, #tpu.memory_space<vmem>>, %arg7: memref<1x128xf32, #tpu.memory_space<vmem>>, %arg8: memref<8x128xf32, #tpu.memory_space<vmem>>) attributes {dimension_semantics = [#tpu.dimension_semantics<parallel>], iteration_bounds = array<i64: 1>, scalar_prefetch = 0 : i64, scratch_operands = 0 : i64, tpu.core_type = #tpu.core_type<tc>, window_params = [{transform_indices = @transform_0, window_bounds = array<i64: 8, 16>}, {pipeline_mode = #tpu.pipeline_mode<synchronous>, transform_indices = @transform_1, window_bounds = array<i64: 16, 32>}, {pipeline_mode = #tpu.pipeline_mode<synchronous>, transform_indices = @transform_2, window_bounds = array<i64: 1, 32>}, {pipeline_mode = #tpu.pipeline_mode<synchronous>, transform_indices = @transform_3, window_bounds = array<i64: 32, 64>}, {pipeline_mode = #tpu.pipeline_mode<synchronous>, transform_indices = @transform_4, window_bounds = array<i64: 1, 64>}, {pipeline_mode = #tpu.pipeline_mode<synchronous>, transform_indices = @transform_5, window_bounds = array<i64: 64, 128>}, {pipeline_mode = #tpu.pipeline_mode<synchronous>, transform_indices = @transform_6, window_bounds = array<i64: 1, 128>}, {transform_indices = @transform_7, window_bounds = array<i64: 8, 128>}]} {
    %c0 = arith.constant 0 : index
    %c0_0 = arith.constant 0 : index
    %0 = vector.load %arg1[%c0, %c0_0] : memref<8x16xf32, #tpu.memory_space<vmem>>, vector<8x16xf32>
    %c0_1 = arith.constant 0 : index
    %c0_2 = arith.constant 0 : index
    %1 = vector.load %arg2[%c0_1, %c0_2] : memref<16x32xf32, #tpu.memory_space<vmem>>, vector<16x32xf32>
    %cst = arith.constant dense<0.000000e+00> : vector<8x32xf32>
    %2 = tpu.matmul %0, %1, %cst {dimension_numbers = #tpu.dot_dimension_numbers<[1], [0], [0], [1], [0, 0, 1, 1], [], []>} : vector<8x16xf32>, vector<16x32xf32>, vector<8x32xf32> -> vector<8x32xf32>
    %c0_3 = arith.constant 0 : index
    %c0_4 = arith.constant 0 : index
    %3 = vector.load %arg3[%c0_3, %c0_4] : memref<1x32xf32, #tpu.memory_space<vmem>>, vector<1x32xf32>
    %4 = vector.broadcast %3 : vector<1x32xf32> to vector<8x32xf32>
    %5 = arith.addf %2, %4 : vector<8x32xf32>
    %cst_5 = arith.constant 0.000000e+00 : f32
    %6 = vector.broadcast %cst_5 : f32 to vector<8x32xf32>
    %7 = arith.cmpf oge, %5, %6 : vector<8x32xf32>
    %cst_6 = arith.constant 0.00999999977 : f32
    %8 = vector.broadcast %cst_6 : f32 to vector<8x32xf32>
    %9 = arith.mulf %8, %5 : vector<8x32xf32>
    %10 = arith.select %7, %5, %9 : vector<8x32xi1>, vector<8x32xf32>
    %cst_7 = arith.constant dense<0.000000e+00> : vector<8xf32>
    %11 = vector.multi_reduction <add>, %10, %cst_7 [1] : vector<8x32xf32> to vector<8xf32>
    %12 = vector.shape_cast %11 : vector<8xf32> to vector<8x1xf32>
    %cst_8 = arith.constant 3.200000e+01 : f32
    %13 = vector.broadcast %cst_8 : f32 to vector<8x1xf32>
    %14 = arith.divf %12, %13 : vector<8x1xf32>
    %15 = arith.mulf %10, %10 : vector<8x32xf32>
    %cst_9 = arith.constant dense<0.000000e+00> : vector<8xf32>
    %16 = vector.multi_reduction <add>, %15, %cst_9 [1] : vector<8x32xf32> to vector<8xf32>
    %17 = vector.shape_cast %16 : vector<8xf32> to vector<8x1xf32>
    %cst_10 = arith.constant 3.200000e+01 : f32
    %18 = vector.broadcast %cst_10 : f32 to vector<8x1xf32>
    %19 = arith.divf %17, %18 : vector<8x1xf32>
    %20 = arith.mulf %14, %14 : vector<8x1xf32>
    %21 = arith.subf %19, %20 : vector<8x1xf32>
    %22 = vector.broadcast %14 : vector<8x1xf32> to vector<8x32xf32>
    %23 = arith.subf %10, %22 : vector<8x32xf32>
    %cst_11 = arith.constant 9.99999974E-6 : f32
    %24 = vector.broadcast %cst_11 : f32 to vector<8x1xf32>
    %25 = arith.addf %21, %24 : vector<8x1xf32>
    %26 = math.rsqrt %25 : vector<8x1xf32>
    %27 = vector.broadcast %26 : vector<8x1xf32> to vector<8x32xf32>
    %28 = arith.mulf %23, %27 : vector<8x32xf32>
    %c0_12 = arith.constant 0 : index
    %c0_13 = arith.constant 0 : index
    %29 = vector.load %arg4[%c0_12, %c0_13] : memref<32x64xf32, #tpu.memory_space<vmem>>, vector<32x64xf32>
    %cst_14 = arith.constant dense<0.000000e+00> : vector<8x64xf32>
    %30 = tpu.matmul %28, %29, %cst_14 {dimension_numbers = #tpu.dot_dimension_numbers<[1], [0], [0], [1], [0, 0, 1, 1], [], []>} : vector<8x32xf32>, vector<32x64xf32>, vector<8x64xf32> -> vector<8x64xf32>
    %c0_15 = arith.constant 0 : index
    %c0_16 = arith.constant 0 : index
    %31 = vector.load %arg5[%c0_15, %c0_16] : memref<1x64xf32, #tpu.memory_space<vmem>>, vector<1x64xf32>
    %32 = vector.broadcast %31 : vector<1x64xf32> to vector<8x64xf32>
    %33 = arith.addf %30, %32 : vector<8x64xf32>
    %cst_17 = arith.constant 0.000000e+00 : f32
    %34 = vector.broadcast %cst_17 : f32 to vector<8x64xf32>
    %35 = arith.cmpf oge, %33, %34 : vector<8x64xf32>
    %cst_18 = arith.constant 0.00999999977 : f32
    %36 = vector.broadcast %cst_18 : f32 to vector<8x64xf32>
    %37 = arith.mulf %36, %33 : vector<8x64xf32>
    %38 = arith.select %35, %33, %37 : vector<8x64xi1>, vector<8x64xf32>
    %cst_19 = arith.constant dense<0.000000e+00> : vector<8xf32>
    %39 = vector.multi_reduction <add>, %38, %cst_19 [1] : vector<8x64xf32> to vector<8xf32>
    %40 = vector.shape_cast %39 : vector<8xf32> to vector<8x1xf32>
    %cst_20 = arith.constant 6.400000e+01 : f32
    %41 = vector.broadcast %cst_20 : f32 to vector<8x1xf32>
    %42 = arith.divf %40, %41 : vector<8x1xf32>
    %43 = arith.mulf %38, %38 : vector<8x64xf32>
    %cst_21 = arith.constant dense<0.000000e+00> : vector<8xf32>
    %44 = vector.multi_reduction <add>, %43, %cst_21 [1] : vector<8x64xf32> to vector<8xf32>
    %45 = vector.shape_cast %44 : vector<8xf32> to vector<8x1xf32>
    %cst_22 = arith.constant 6.400000e+01 : f32
    %46 = vector.broadcast %cst_22 : f32 to vector<8x1xf32>
    %47 = arith.divf %45, %46 : vector<8x1xf32>
    %48 = arith.mulf %42, %42 : vector<8x1xf32>
    %49 = arith.subf %47, %48 : vector<8x1xf32>
    %50 = vector.broadcast %42 : vector<8x1xf32> to vector<8x64xf32>
    %51 = arith.subf %38, %50 : vector<8x64xf32>
    %cst_23 = arith.constant 9.99999974E-6 : f32
    %52 = vector.broadcast %cst_23 : f32 to vector<8x1xf32>
    %53 = arith.addf %49, %52 : vector<8x1xf32>
    %54 = math.rsqrt %53 : vector<8x1xf32>
    %55 = vector.broadcast %54 : vector<8x1xf32> to vector<8x64xf32>
    %56 = arith.mulf %51, %55 : vector<8x64xf32>
    %c0_24 = arith.constant 0 : index
    %c0_25 = arith.constant 0 : index
    %57 = vector.load %arg6[%c0_24, %c0_25] : memref<64x128xf32, #tpu.memory_space<vmem>>, vector<64x128xf32>
    %cst_26 = arith.constant dense<0.000000e+00> : vector<8x128xf32>
    %58 = tpu.matmul %56, %57, %cst_26 {dimension_numbers = #tpu.dot_dimension_numbers<[1], [0], [0], [1], [0, 0, 1, 1], [], []>} : vector<8x64xf32>, vector<64x128xf32>, vector<8x128xf32> -> vector<8x128xf32>
    %c0_27 = arith.constant 0 : index
    %c0_28 = arith.constant 0 : index
    %59 = vector.load %arg7[%c0_27, %c0_28] : memref<1x128xf32, #tpu.memory_space<vmem>>, vector<1x128xf32>
    %60 = vector.broadcast %59 : vector<1x128xf32> to vector<8x128xf32>
    %61 = arith.addf %58, %60 : vector<8x128xf32>
    %c0_29 = arith.constant 0 : index
    %c0_30 = arith.constant 0 : index
    %62 = vector.load %arg8[%c0_29, %c0_30] : memref<8x128xf32, #tpu.memory_space<vmem>>, vector<8x128xf32>
    tpu.vector_store %arg8[%c0_29, %c0_30], %61 {strides = array<i32>} : memref<8x128xf32, #tpu.memory_space<vmem>>, vector<8x128xf32>,
    return
  }
  func.func @transform_0(%arg0: i32) -> (i32, i32) {
    %c0_i32 = arith.constant 0 : i32
    %c0_i32_0 = arith.constant 0 : i32
    return %arg0, %c0_i32 : i32, i32
  }
  func.func @transform_1(%arg0: i32) -> (i32, i32) {
    %c0_i32 = arith.constant 0 : i32
    %c0_i32_0 = arith.constant 0 : i32
    %c0_i32_1 = arith.constant 0 : i32
    return %c0_i32, %c0_i32_0 : i32, i32
  }
  func.func @transform_2(%arg0: i32) -> (i32, i32) {
    %c0_i32 = arith.constant 0 : i32
    %c0_i32_0 = arith.constant 0 : i32
    %c0_i32_1 = arith.constant 0 : i32
    return %c0_i32, %c0_i32_0 : i32, i32
  }
  func.func @transform_3(%arg0: i32) -> (i32, i32) {
    %c0_i32 = arith.constant 0 : i32
    %c0_i32_0 = arith.constant 0 : i32
    %c0_i32_1 = arith.constant 0 : i32
    return %c0_i32, %c0_i32_0 : i32, i32
  }
  func.func @transform_4(%arg0: i32) -> (i32, i32) {
    %c0_i32 = arith.constant 0 : i32
    %c0_i32_0 = arith.constant 0 : i32
    %c0_i32_1 = arith.constant 0 : i32
    return %c0_i32, %c0_i32_0 : i32, i32
  }
  func.func @transform_5(%arg0: i32) -> (i32, i32) {
    %c0_i32 = arith.constant 0 : i32
    %c0_i32_0 = arith.constant 0 : i32
    %c0_i32_1 = arith.constant 0 : i32
    return %c0_i32, %c0_i32_0 : i32, i32
  }
  func.func @transform_6(%arg0: i32) -> (i32, i32) {
    %c0_i32 = arith.constant 0 : i32
    %c0_i32_0 = arith.constant 0 : i32
    %c0_i32_1 = arith.constant 0 : i32
    return %c0_i32, %c0_i32_0 : i32, i32
  }
  func.func @transform_7(%arg0: i32) -> (i32, i32) {
    %c0_i32 = arith.constant 0 : i32
    %c0_i32_0 = arith.constant 0 : i32
    return %arg0, %c0_i32 : i32, i32
  }
}

</mosaic_0001>

<llo_original>
// kernel: tpu_custom_call.1
$region0: #{tpu_custom_call.1}
  #allocation0 [shape = 'u32[]', space=smem, size = 0x4, offset = 0x4, fixed_abs, tag = 'smem constant byte address 0x4 - core index']
  #allocation1 [shape = 'u32[144,128]{1,0:T(1,128)}', space=vmem, size = 0x12000, scoped, tag = 'internal scratch']
  %s0 = inlined_call_operand.hbm [shape: f32[8,16], index: 0, kind: input, shape index: {}]
  %s1 = inlined_call_operand.hbm [shape: f32[16,32], index: 1, kind: input, shape index: {}]
  %s2 = inlined_call_operand.vmem [shape: f32[1,32], index: 2, kind: input, shape index: {}]
  %s3 = inlined_call_operand.hbm [shape: f32[32,64], index: 3, kind: input, shape index: {}]
  %s4 = inlined_call_operand.vmem [shape: f32[1,64], index: 4, kind: input, shape index: {}]
  %s5 = inlined_call_operand.hbm [shape: f32[64,128], index: 5, kind: input, shape index: {}]
  %s6 = inlined_call_operand.vmem [shape: f32[1,128], index: 6, kind: input, shape index: {}]
  %s7 = inlined_call_operand.hbm [shape: f32[8,128], index: 7, kind: output, shape index: {}]
  %s8 = sld [smem:[#allocation0]]
  $region54: #{tpu_custom_call.1} parent=0
    _
  %s10 = ssub.s32 1, %s8
  %s11 = scalar_select 0, %s10, %s8
  $region1: #{tpu_custom_call.1} parent=0
    #allocation2 [shape = 'u8[4096]{0}', space=vmem, size = 0x1000, scoped, tag = 'input window, operand 0, single buffered']
    #allocation3 [shape = 's32[1]{0}', space=sflag, size = 0x4, scoped, tag = 'scoped memory for tpu_custom_call.1']
    #allocation4 [shape = 's32[1]{0}', space=sflag, size = 0x4, scoped, tag = 'scoped memory for tpu_custom_call.1']
    #allocation5 [shape = 'u8[8192]{0}', space=vmem, size = 0x2000, scoped, tag = 'input window, operand 1, single buffered']
    #allocation6 [shape = 's32[1]{0}', space=sflag, size = 0x4, scoped, tag = 'scoped memory for tpu_custom_call.1']
    #allocation7 [shape = 'u8[16384]{0}', space=vmem, size = 0x4000, scoped, tag = 'input window, operand 3, single buffered']
    #allocation8 [shape = 'u8[32768]{0}', space=vmem, size = 0x8000, scoped, tag = 'input window, operand 5, single buffered']
    #allocation9 [shape = 's32[1]{0}', space=sflag, size = 0x4, scoped, tag = 'scoped memory for tpu_custom_call.1']
    #allocation10 [shape = 'u8[4096]{0}', space=vmem, size = 0x1000, scoped, tag = 'output window, operand 0, single buffered']
    %12 = vsyncpa [#allocation3], 0
    %13 = vsyncpa [#allocation6], 0
    %14 = vsyncpa [#allocation9], 0
    %15 = vsyncpa [#allocation4], 0
    // Predicated region
    $region2: #{tpu_custom_call.1} parent=1 // pred_check
      _
    $region3: #{tpu_custom_call.1} parent=1 // pred_check_branch
      %17 = sbr.rel (0) target = $region5
    $region4: #{tpu_custom_call.1} parent=1 // pred_region
      %s19 = ssub.s32 128, 128
      %20 = vsyncadd [#allocation3], %s19
      %s22 = sshll.u32 [#allocation2], 4
      %s23 = int_to_ptr.vmem [resolvable:$true] %s22
      %25 = dma.hbm_to_vmem [thread:$0]  %s0, 128, %s23, [#allocation3]
    $region5: #{tpu_custom_call.1} parent=1 // pred_fallthru
      _
    // Predicated region
    $region6: #{tpu_custom_call.1} parent=1 // pred_check
      _
    $region7: #{tpu_custom_call.1} parent=1 // pred_check_branch
      %27 = sbr.rel (0) target = $region9
    $region8: #{tpu_custom_call.1} parent=1 // pred_region
      %s29 = ssub.s32 256, 256
      %30 = vsyncadd [#allocation6], %s29
      %s31 = sshll.u32 [#allocation5], 4
      %s32 = int_to_ptr.vmem [resolvable:$true] %s31
      %37 = dma.hbm_to_vmem [thread:$0]  %s1, 256, %s32, [#allocation6], 128, 128, 8
    $region9: #{tpu_custom_call.1} parent=1 // pred_fallthru
      _
    // Predicated region
    $region10: #{tpu_custom_call.1} parent=1 // pred_check
      _
    $region11: #{tpu_custom_call.1} parent=1 // pred_check_branch
      %39 = sbr.rel (0) target = $region13
    $region12: #{tpu_custom_call.1} parent=1 // pred_region
      _
    $region13: #{tpu_custom_call.1} parent=1 // pred_fallthru
      _
    // Predicated region
    $region14: #{tpu_custom_call.1} parent=1 // pred_check
      _
    $region15: #{tpu_custom_call.1} parent=1 // pred_check_branch
      %41 = sbr.rel (0) target = $region17
    $region16: #{tpu_custom_call.1} parent=1 // pred_region
      %s43 = ssub.s32 512, 512
      %44 = vsyncadd [#allocation6], %s43
      %s45 = sshll.u32 [#allocation7], 4
      %s46 = int_to_ptr.vmem [resolvable:$true] %s45
      %51 = dma.hbm_to_vmem [thread:$0]  %s3, 512, %s46, [#allocation6], 128, 128, 8
    $region17: #{tpu_custom_call.1} parent=1 // pred_fallthru
      _
    // Predicated region
    $region18: #{tpu_custom_call.1} parent=1 // pred_check
      _
    $region19: #{tpu_custom_call.1} parent=1 // pred_check_branch
      %53 = sbr.rel (0) target = $region21
    $region20: #{tpu_custom_call.1} parent=1 // pred_region
      _
    $region21: #{tpu_custom_call.1} parent=1 // pred_fallthru
      _
    // Predicated region
    $region22: #{tpu_custom_call.1} parent=1 // pred_check
      _
    $region23: #{tpu_custom_call.1} parent=1 // pred_check_branch
      %55 = sbr.rel (0) target = $region25
    $region24: #{tpu_custom_call.1} parent=1 // pred_region
      %s57 = ssub.s32 1024, 1024
      %58 = vsyncadd [#allocation9], %s57
      %s59 = sshll.u32 [#allocation8], 4
      %s60 = int_to_ptr.vmem [resolvable:$true] %s59
      %65 = dma.hbm_to_vmem [thread:$0]  %s5, 1024, %s60, [#allocation9], 128, 128, 8
    $region25: #{tpu_custom_call.1} parent=1 // pred_fallthru
      _
    // Predicated region
    $region26: #{tpu_custom_call.1} parent=1 // pred_check
      _
    $region27: #{tpu_custom_call.1} parent=1 // pred_check_branch
      %67 = sbr.rel (0) target = $region29
    $region28: #{tpu_custom_call.1} parent=1 // pred_region
      _
    $region29: #{tpu_custom_call.1} parent=1 // pred_fallthru
      _
    // Predicated region
    $region30: #{tpu_custom_call.1} parent=1 // pred_check
      _
    $region31: #{tpu_custom_call.1} parent=1 // pred_check_branch
      %69 = sbr.rel (0) target = $region33
    $region32: #{tpu_custom_call.1} parent=1 // pred_region
      %70 = dma.done [#allocation3], 128
    $region33: #{tpu_custom_call.1} parent=1 // pred_fallthru
      _
    // Predicated region
    $region34: #{tpu_custom_call.1} parent=1 // pred_check
      _
    $region35: #{tpu_custom_call.1} parent=1 // pred_check_branch
      %72 = sbr.rel (0) target = $region37
    $region36: #{tpu_custom_call.1} parent=1 // pred_region
      %73 = dma.done [#allocation6], 256
    $region37: #{tpu_custom_call.1} parent=1 // pred_fallthru
      _
    // Predicated region
    $region38: #{tpu_custom_call.1} parent=1 // pred_check
      _
    $region39: #{tpu_custom_call.1} parent=1 // pred_check_branch
      %75 = sbr.rel (0) target = $region41
    $region40: #{tpu_custom_call.1} parent=1 // pred_region
      %76 = dma.done [#allocation6], 512
    $region41: #{tpu_custom_call.1} parent=1 // pred_fallthru
      _
    // Predicated region
    $region42: #{tpu_custom_call.1} parent=1 // pred_check
      _
    $region43: #{tpu_custom_call.1} parent=1 // pred_check_branch
      %78 = sbr.rel (0) target = $region45
    $region44: #{tpu_custom_call.1} parent=1 // pred_region
      %79 = dma.done [#allocation9], 1024
    $region45: #{tpu_custom_call.1} parent=1 // pred_fallthru
      _
    %v80 = vld [vmem:[#allocation2] sm:$0xff]
    %v81 = vld [vmem:[#allocation5] sm:$0xff]
    %v82 = vld [vmem:[#allocation5 + $0x8] sm:$0xff]
    %v83 = vld [vmem:[%s2] sm:$0x1]
    %v85 = vlaneseq
    %v86 = vshrl.u32 %v85, 7
    %v87 = vsub.s32 0, %v86
    %v88 = vrot.slane %v83, %v87
    %vm90 = vcmask 130048
    %v92 = vsel %vm90, %v80, 0
    %94 = vmatprep.subr.mxu0 0.0
    %95 = vmatpush1.msra.mxu0 0.0
    %96 = vmatprep.subr.mxu0 0.0
    %97 = vmatpush1.msra.mxu0 0.0
    %98 = vmatprep.subr.mxu0 0.0
    %99 = vmatpush1.msra.mxu0 0.0
    %100 = vmatprep.subr.mxu0 0.0
    %101 = vmatpush1.msra.mxu0 0.0
    %102 = vmatprep.subr.mxu0 0.0
    %103 = vmatpush1.msra.mxu0 0.0
    %104 = vmatprep.subr.mxu0 0.0
    %105 = vmatpush1.msra.mxu0 0.0
    %106 = vmatprep.subr.mxu0 0.0
    %107 = vmatpush1.msra.mxu0 0.0
    %108 = vmatprep.subr.mxu0 0.0
    %109 = vmatpush1.msra.mxu0 0.0
    %110 = vmatprep.subr.mxu0 0.0
    %111 = vmatpush1.msra.mxu0 0.0
    %112 = vmatprep.subr.mxu0 0.0
    %113 = vmatpush1.msra.mxu0 0.0
    %114 = vmatprep.subr.mxu0 0.0
    %115 = vmatpush1.msra.mxu0 0.0
    %116 = vmatprep.subr.mxu0 0.0
    %117 = vmatpush1.msra.mxu0 0.0
    %118 = vmatprep.subr.mxu0 0.0
    %119 = vmatpush1.msra.mxu0 0.0
    %120 = vmatprep.subr.mxu0 0.0
    %121 = vmatpush1.msra.mxu0 0.0
    %122 = vmatprep.subr.mxu0 0.0
    %123 = vmatpush1.msra.mxu0 %v82
    %124 = vmatprep.subr.mxu0 0.0
    %125 = vmatpush1.msra.mxu0 %v81
    %126 = vmatprep.subr.mxu0 0.0
    %127 = vmatpush2.msra.mxu0 0.0
    %128 = vmatprep.subr.mxu0 0.0
    %129 = vmatpush2.msra.mxu0 0.0
    %130 = vmatprep.subr.mxu0 0.0
    %131 = vmatpush2.msra.mxu0 0.0
    %132 = vmatprep.subr.mxu0 0.0
    %133 = vmatpush2.msra.mxu0 0.0
    %134 = vmatprep.subr.mxu0 0.0
    %135 = vmatpush2.msra.mxu0 0.0
    %136 = vmatprep.subr.mxu0 0.0
    %137 = vmatpush2.msra.mxu0 0.0
    %138 = vmatprep.subr.mxu0 0.0
    %139 = vmatpush2.msra.mxu0 0.0
    %140 = vmatprep.subr.mxu0 0.0
    %141 = vmatpush2.msra.mxu0 0.0
    %142 = vmatprep.subr.mxu0 0.0
    %143 = vmatpush2.msra.mxu0 0.0
    %144 = vmatprep.subr.mxu0 0.0
    %145 = vmatpush2.msra.mxu0 0.0
    %146 = vmatprep.subr.mxu0 0.0
    %147 = vmatpush2.msra.mxu0 0.0
    %148 = vmatprep.subr.mxu0 0.0
    %149 = vmatpush2.msra.mxu0 0.0
    %150 = vmatprep.subr.mxu0 0.0
    %151 = vmatpush2.msra.mxu0 0.0
    %152 = vmatprep.subr.mxu0 0.0
    %153 = vmatpush2.msra.mxu0 0.0
    %154 = vmatprep.subr.mxu0 0.0
    %155 = vmatpush2.msra.mxu0 0.0
    %156 = vmatprep.subr.mxu0 0.0
    %157 = vmatpush2.msra.mxu0 0.0
    %158 = vmatprep.mubr.f32.mxu0 0.0
    %159 = vmatmul.mubr.f32.gmra.mxu0 %v92
    %v160 = vpop.f32.mrf.mxu0
    %v161 = vadd.f32 %v88, %v160
    %v162 = vpop.f32.mrf.mxu0
    %163 = vdwg.mxu0
    %vm164 = vcmp.ge.f32.partialorder %v161, 0.0
    %v165 = vmul.f32 %v161, 0.01
    %v166 = vsel %vm164, %v161, %v165
    %vm167 = vcmask 261120
    %v168 = vsel %vm167, %v166, 0.0
    %169 = vadd.xlane.f32.xlu0 %v168
    %v170 = vpop.xlane.xlu0 %169
    %v171 = vrcp.pop 32.0
    %v172 = vmul.f32 %v170, %v171
    %v173 = vmul.f32 %v166, %v166
    %v174 = vsel %vm167, %v173, 0.0
    %175 = vadd.xlane.f32.xlu0 %v174
    %v176 = vpop.xlane.xlu0 %175
    %v177 = vmul.f32 %v176, %v171
    %v178 = vmul.f32 %v172, %v172
    %v179 = vsub.f32 %v177, %v178
    %v180 = vsub.f32 %v166, %v172
    %v181 = vadd.f32 %v179, 1e-05
    %v182 = vrsqrt.pop %v181
    %v183 = vmul.f32 %v180, %v182
    %v184 = vld [vmem:[#allocation7] sm:$0xff]
    %v185 = vld [vmem:[#allocation7 + $0x8] sm:$0xff]
    %v186 = vld [vmem:[#allocation7 + $0x10] sm:$0xff]
    %v187 = vld [vmem:[#allocation7 + $0x18] sm:$0xff]
    %v188 = vld [vmem:[%s4] sm:$0x1]
    %v190 = vlaneseq
    %v191 = vshrl.u32 %v190, 7
    %v192 = vsub.s32 0, %v191
    %v193 = vrot.slane %v188, %v192
    %v196 = vsel %vm167, %v183, 0
    %198 = vmatprep.subr.mxu0 0.0
    %199 = vmatpush1.msra.mxu0 0.0
    %200 = vmatprep.subr.mxu0 0.0
    %201 = vmatpush1.msra.mxu0 0.0
    %202 = vmatprep.subr.mxu0 0.0
    %203 = vmatpush1.msra.mxu0 0.0
    %204 = vmatprep.subr.mxu0 0.0
    %205 = vmatpush1.msra.mxu0 0.0
    %206 = vmatprep.subr.mxu0 0.0
    %207 = vmatpush1.msra.mxu0 0.0
    %208 = vmatprep.subr.mxu0 0.0
    %209 = vmatpush1.msra.mxu0 0.0
    %210 = vmatprep.subr.mxu0 0.0
    %211 = vmatpush1.msra.mxu0 0.0
    %212 = vmatprep.subr.mxu0 0.0
    %213 = vmatpush1.msra.mxu0 0.0
    %214 = vmatprep.subr.mxu0 0.0
    %215 = vmatpush1.msra.mxu0 0.0
    %216 = vmatprep.subr.mxu0 0.0
    %217 = vmatpush1.msra.mxu0 0.0
    %218 = vmatprep.subr.mxu0 0.0
    %219 = vmatpush1.msra.mxu0 0.0
    %220 = vmatprep.subr.mxu0 0.0
    %221 = vmatpush1.msra.mxu0 0.0
    %222 = vmatprep.subr.mxu0 0.0
    %223 = vmatpush1.msra.mxu0 %v187
    %224 = vmatprep.subr.mxu0 0.0
    %225 = vmatpush1.msra.mxu0 %v186
    %226 = vmatprep.subr.mxu0 0.0
    %227 = vmatpush1.msra.mxu0 %v185
    %228 = vmatprep.subr.mxu0 0.0
    %229 = vmatpush1.msra.mxu0 %v184
    %230 = vmatprep.subr.mxu0 0.0
    %231 = vmatpush2.msra.mxu0 0.0
    %232 = vmatprep.subr.mxu0 0.0
    %233 = vmatpush2.msra.mxu0 0.0
    %234 = vmatprep.subr.mxu0 0.0
    %235 = vmatpush2.msra.mxu0 0.0
    %236 = vmatprep.subr.mxu0 0.0
    %237 = vmatpush2.msra.mxu0 0.0
    %238 = vmatprep.subr.mxu0 0.0
    %239 = vmatpush2.msra.mxu0 0.0
    %240 = vmatprep.subr.mxu0 0.0
    %241 = vmatpush2.msra.mxu0 0.0
    %242 = vmatprep.subr.mxu0 0.0
    %243 = vmatpush2.msra.mxu0 0.0
    %244 = vmatprep.subr.mxu0 0.0
    %245 = vmatpush2.msra.mxu0 0.0
    %246 = vmatprep.subr.mxu0 0.0
    %247 = vmatpush2.msra.mxu0 0.0
    %248 = vmatprep.subr.mxu0 0.0
    %249 = vmatpush2.msra.mxu0 0.0
    %250 = vmatprep.subr.mxu0 0.0
    %251 = vmatpush2.msra.mxu0 0.0
    %252 = vmatprep.subr.mxu0 0.0
    %253 = vmatpush2.msra.mxu0 0.0
    %254 = vmatprep.subr.mxu0 0.0
    %255 = vmatpush2.msra.mxu0 0.0
    %256 = vmatprep.subr.mxu0 0.0
    %257 = vmatpush2.msra.mxu0 0.0
    %258 = vmatprep.subr.mxu0 0.0
    %259 = vmatpush2.msra.mxu0 0.0
    %260 = vmatprep.subr.mxu0 0.0
    %261 = vmatpush2.msra.mxu0 0.0
    %262 = vmatprep.mubr.f32.mxu0 0.0
    %263 = vmatmul.mubr.f32.gmra.mxu0 %v196
    %v264 = vpop.f32.mrf.mxu0
    %v265 = vadd.f32 %v193, %v264
    %v266 = vpop.f32.mrf.mxu0
    %267 = vdwg.mxu0
    %vm268 = vcmp.ge.f32.partialorder %v265, 0.0
    %v269 = vmul.f32 %v265, 0.01
    %v270 = vsel %vm268, %v265, %v269
    %vm271 = vcmask 523264
    %v272 = vsel %vm271, %v270, 0.0
    %273 = vadd.xlane.f32.xlu0 %v272
    %v274 = vpop.xlane.xlu0 %273
    %v275 = vrcp.pop 64.0
    %v276 = vmul.f32 %v274, %v275
    %v277 = vmul.f32 %v270, %v270
    %v278 = vsel %vm271, %v277, 0.0
    %279 = vadd.xlane.f32.xlu0 %v278
    %v280 = vpop.xlane.xlu0 %279
    %v281 = vmul.f32 %v280, %v275
    %v282 = vmul.f32 %v276, %v276
    %v283 = vsub.f32 %v281, %v282
    %v284 = vsub.f32 %v270, %v276
    %v285 = vadd.f32 %v283, 1e-05
    %v286 = vrsqrt.pop %v285
    %v287 = vmul.f32 %v284, %v286
    %v288 = vld [vmem:[#allocation8] sm:$0xff]
    %v289 = vld [vmem:[#allocation8 + $0x8] sm:$0xff]
    %v290 = vld [vmem:[#allocation8 + $0x10] sm:$0xff]
    %v291 = vld [vmem:[#allocation8 + $0x18] sm:$0xff]
    %v292 = vld [vmem:[#allocation8 + $0x20] sm:$0xff]
    %v293 = vld [vmem:[#allocation8 + $0x28] sm:$0xff]
    %v294 = vld [vmem:[#allocation8 + $0x30] sm:$0xff]
    %v295 = vld [vmem:[#allocation8 + $0x38] sm:$0xff]
    %v296 = vld [vmem:[%s6] sm:$0x1]
    %v298 = vlaneseq
    %v299 = vshrl.u32 %v298, 7
    %v300 = vsub.s32 0, %v299
    %v301 = vrot.slane %v296, %v300
    %v304 = vsel %vm271, %v287, 0
    %306 = vmatprep.subr.mxu0 0.0
    %307 = vmatpush1.msra.mxu0 0.0
    %308 = vmatprep.subr.mxu0 0.0
    %309 = vmatpush1.msra.mxu0 0.0
    %310 = vmatprep.subr.mxu0 0.0
    %311 = vmatpush1.msra.mxu0 0.0
    %312 = vmatprep.subr.mxu0 0.0
    %313 = vmatpush1.msra.mxu0 0.0
    %314 = vmatprep.subr.mxu0 0.0
    %315 = vmatpush1.msra.mxu0 0.0
    %316 = vmatprep.subr.mxu0 0.0
    %317 = vmatpush1.msra.mxu0 0.0
    %318 = vmatprep.subr.mxu0 0.0
    %319 = vmatpush1.msra.mxu0 0.0
    %320 = vmatprep.subr.mxu0 0.0
    %321 = vmatpush1.msra.mxu0 0.0
    %322 = vmatprep.subr.mxu0 0.0
    %323 = vmatpush1.msra.mxu0 %v295
    %324 = vmatprep.subr.mxu0 0.0
    %325 = vmatpush1.msra.mxu0 %v294
    %326 = vmatprep.subr.mxu0 0.0
    %327 = vmatpush1.msra.mxu0 %v293
    %328 = vmatprep.subr.mxu0 0.0
    %329 = vmatpush1.msra.mxu0 %v292
    %330 = vmatprep.subr.mxu0 0.0
    %331 = vmatpush1.msra.mxu0 %v291
    %332 = vmatprep.subr.mxu0 0.0
    %333 = vmatpush1.msra.mxu0 %v290
    %334 = vmatprep.subr.mxu0 0.0
    %335 = vmatpush1.msra.mxu0 %v289
    %336 = vmatprep.subr.mxu0 0.0
    %337 = vmatpush1.msra.mxu0 %v288
    %338 = vmatprep.subr.mxu0 0.0
    %339 = vmatpush2.msra.mxu0 0.0
    %340 = vmatprep.subr.mxu0 0.0
    %341 = vmatpush2.msra.mxu0 0.0
    %342 = vmatprep.subr.mxu0 0.0
    %343 = vmatpush2.msra.mxu0 0.0
    %344 = vmatprep.subr.mxu0 0.0
    %345 = vmatpush2.msra.mxu0 0.0
    %346 = vmatprep.subr.mxu0 0.0
    %347 = vmatpush2.msra.mxu0 0.0
    %348 = vmatprep.subr.mxu0 0.0
    %349 = vmatpush2.msra.mxu0 0.0
    %350 = vmatprep.subr.mxu0 0.0
    %351 = vmatpush2.msra.mxu0 0.0
    %352 = vmatprep.subr.mxu0 0.0
    %353 = vmatpush2.msra.mxu0 0.0
    %354 = vmatprep.subr.mxu0 0.0
    %355 = vmatpush2.msra.mxu0 0.0
    %356 = vmatprep.subr.mxu0 0.0
    %357 = vmatpush2.msra.mxu0 0.0
    %358 = vmatprep.subr.mxu0 0.0
    %359 = vmatpush2.msra.mxu0 0.0
    %360 = vmatprep.subr.mxu0 0.0
    %361 = vmatpush2.msra.mxu0 0.0
    %362 = vmatprep.subr.mxu0 0.0
    %363 = vmatpush2.msra.mxu0 0.0
    %364 = vmatprep.subr.mxu0 0.0
    %365 = vmatpush2.msra.mxu0 0.0
    %366 = vmatprep.subr.mxu0 0.0
    %367 = vmatpush2.msra.mxu0 0.0
    %368 = vmatprep.subr.mxu0 0.0
    %369 = vmatpush2.msra.mxu0 0.0
    %370 = vmatprep.mubr.f32.mxu0 0.0
    %371 = vmatmul.mubr.f32.gmra.mxu0 %v304
    %v372 = vpop.f32.mrf.mxu0
    %v373 = vadd.f32 %v301, %v372
    %v374 = vpop.f32.mrf.mxu0
    %375 = vdwg.mxu0
    %376 = vst [vmem:[#allocation10] sm:$0xff] %v373
    // Predicated region
    $region46: #{tpu_custom_call.1} parent=1 // pred_check
      _
    $region47: #{tpu_custom_call.1} parent=1 // pred_check_branch
      %378 = sbr.rel (0) target = $region49
    $region48: #{tpu_custom_call.1} parent=1 // pred_region
      %s380 = ssub.s32 128, 128
      %381 = vsyncadd [#allocation4], %s380
      %s383 = sshll.u32 [#allocation10], 4
      %s384 = int_to_ptr.vmem [resolvable:$true] %s383
      %386 = dma.vmem_to_hbm [thread:$0]  %s384, 128, %s7, [#allocation4]
    $region49: #{tpu_custom_call.1} parent=1 // pred_fallthru
      _
    // Predicated region
    $region50: #{tpu_custom_call.1} parent=1 // pred_check
      _
    $region51: #{tpu_custom_call.1} parent=1 // pred_check_branch
      %388 = sbr.rel (0) target = $region53
    $region52: #{tpu_custom_call.1} parent=1 // pred_region
      %389 = dma.done [#allocation4], 128
    $region53: #{tpu_custom_call.1} parent=1 // pred_fallthru
      _
    %390 = vsyncpa [#allocation3], 1
    %391 = vsyncpa [#allocation6], 1
    %392 = vsyncpa [#allocation9], 1
    %393 = vsyncpa [#allocation4], 1

</llo_original>
